<compile_context>
chip_gen: v7x
topology: tpu7x:2x2x1
jax: 0.10.0
libtpu: 0.0.40
codegen_flags: <defaults>
</compile_context>

<pallas_src>
import functools

import jax
import jax.numpy as jnp
from jax.experimental import pallas as pl
from jax.experimental.pallas import tpu as pltpu


def _layernorm_kernel(x_ref, g_ref, b_ref, o_ref, *, eps):
    x = x_ref[...].astype(jnp.float32)            # (rows, H)
    g = g_ref[...]                                # (1, H), already f32
    b = b_ref[...]                                # (1, H), already f32

    n = x.shape[-1]
    mean = jnp.mean(x, axis=-1, keepdims=True)
    diff = x - mean
    # torch.std default: unbiased estimator (Bessel's correction, N-1).
    var = jnp.sum(diff * diff, axis=-1, keepdims=True) * (1.0 / (n - 1))
    std = jnp.sqrt(var)
    # One reciprocal per row (rows, 1) instead of an elementwise divide over
    # (rows, H); broadcast-multiply does the rest on the VPU.
    inv = pl.reciprocal(std + eps, approx=False)
    o_ref[...] = (diff * inv * g + b).astype(o_ref.dtype)


def _shrink_dim(p, last_dim):
    # Mirrors shrink_dim: center-crop the parameter if it is wider than x's last dim.
    if p.shape[-1] > last_dim:
        off = (p.shape[-1] - last_dim) // 2
        p = p[..., off:p.shape[-1] - off]
    return p


def _pick_row_tile(n_rows, h, in_itemsize, out_itemsize,
                   block_budget_bytes=24 * 1024 * 1024, max_rows=1024):
    """Largest multiple-of-8 row tile whose double-buffered in+out blocks fit the budget."""
    # Double-buffered input block + output block per grid step.
    bytes_per_row = h * (in_itemsize + out_itemsize) * 2
    tile = block_budget_bytes // max(bytes_per_row, 1)
    tile = max(8, min(max_rows, (tile // 8) * 8))
    # Don't allocate a block bigger than the (8-padded) number of rows.
    rows_padded = ((n_rows + 7) // 8) * 8
    return min(tile, max(8, rows_padded))


def layer_norm(x, gamma, beta, eps=1e-6):
    """LayerNorm over the last axis of x, matching the PyTorch module semantics."""
    orig_shape = x.shape
    h = orig_shape[-1]
    # Pre-cast params to f32 once in the wrapper (avoids per-step casts in-kernel).
    gamma = _shrink_dim(gamma, h).reshape(1, h).astype(jnp.float32)
    beta = _shrink_dim(beta, h).reshape(1, h).astype(jnp.float32)

    x2 = x.reshape(-1, h)
    n_rows = x2.shape[0]

    # NOTE: for production hidden sizes H should be a multiple of 128 so output
    # stores are lane-dense; small demo H (e.g. 32) is accepted but uses masked stores.
    row_tile = _pick_row_tile(n_rows, h, x2.dtype.itemsize, x2.dtype.itemsize)
    grid = (pl.cdiv(n_rows, row_tile),)   # fixed tile; Pallas masks the ragged tail.

    out = pl.pallas_call(
        functools.partial(_layernorm_kernel, eps=eps),
        out_shape=jax.ShapeDtypeStruct((n_rows, h), x.dtype),
        grid_spec=pltpu.PrefetchScalarGridSpec(
            num_scalar_prefetch=0,
            grid=grid,
            in_specs=[
                pl.BlockSpec((row_tile, h), lambda i: (i, 0)),
                pl.BlockSpec((1, h), lambda i: (0, 0)),
                pl.BlockSpec((1, h), lambda i: (0, 0)),
            ],
            out_specs=pl.BlockSpec((row_tile, h), lambda i: (i, 0)),
        ),
        compiler_params=pltpu.CompilerParams(
            dimension_semantics=("parallel",),          # megacore row sharding (v7x)
            vmem_limit_bytes=48 * 1024 * 1024,          # fits v5e/v6e (128 MiB) and v7x (64 MiB)
        ),
    )(x2, gamma, beta)

    return out.reshape(orig_shape)


if __name__ == "__main__":
    key = jax.random.PRNGKey(0)
    batch, seq, hidden = 2, 8, 32

    x = jax.random.normal(key, (batch, seq, hidden), dtype=jnp.float32)
    # Deterministic parameter init matching nn.Parameter(torch.ones/zeros(features)).
    gamma = jnp.ones((hidden,), dtype=jnp.float32)
    beta = jnp.zeros((hidden,), dtype=jnp.float32)

    y = layer_norm(x, gamma, beta, eps=1e-6)
    jax.block_until_ready(y)

    # Reference check in plain JAX (unbiased std, eps added to std — torch semantics).
    mean = jnp.mean(x, axis=-1, keepdims=True)
    std = jnp.sqrt(jnp.sum((x - mean) ** 2, axis=-1, keepdims=True) / (hidden - 1))
    ref = gamma * (x - mean) / (std + 1e-6) + beta
    assert jnp.allclose(y, ref, atol=1e-5, rtol=1e-5)

    print("KERNEL_OK")
</pallas_src>

<mosaic_0001>
module attributes {stable_mosaic.version = 11 : i64} {
  func.func @_layernorm_kernel(%arg0: i32, %arg1: memref<16x32xf32, #tpu.memory_space<vmem>>, %arg2: memref<1x32xf32, #tpu.memory_space<vmem>>, %arg3: memref<1x32xf32, #tpu.memory_space<vmem>>, %arg4: memref<16x32xf32, #tpu.memory_space<vmem>>) attributes {dimension_semantics = [#tpu.dimension_semantics<parallel>], iteration_bounds = array<i64: 1>, scalar_prefetch = 0 : i64, scratch_operands = 0 : i64, tpu.core_type = #tpu.core_type<tc>, window_params = [{transform_indices = @transform_0, window_bounds = array<i64: 16, 32>}, {pipeline_mode = #tpu.pipeline_mode<synchronous>, transform_indices = @transform_1, window_bounds = array<i64: 1, 32>}, {pipeline_mode = #tpu.pipeline_mode<synchronous>, transform_indices = @transform_2, window_bounds = array<i64: 1, 32>}, {transform_indices = @transform_3, window_bounds = array<i64: 16, 32>}]} {
    %c0 = arith.constant 0 : index
    %c0_0 = arith.constant 0 : index
    %0 = vector.load %arg1[%c0, %c0_0] : memref<16x32xf32, #tpu.memory_space<vmem>>, vector<16x32xf32>
    %c0_1 = arith.constant 0 : index
    %c0_2 = arith.constant 0 : index
    %1 = vector.load %arg2[%c0_1, %c0_2] : memref<1x32xf32, #tpu.memory_space<vmem>>, vector<1x32xf32>
    %c0_3 = arith.constant 0 : index
    %c0_4 = arith.constant 0 : index
    %2 = vector.load %arg3[%c0_3, %c0_4] : memref<1x32xf32, #tpu.memory_space<vmem>>, vector<1x32xf32>
    %cst = arith.constant dense<0.000000e+00> : vector<16xf32>
    %3 = vector.multi_reduction <add>, %0, %cst [1] : vector<16x32xf32> to vector<16xf32>
    %4 = vector.shape_cast %3 : vector<16xf32> to vector<16x1xf32>
    %cst_5 = arith.constant 3.200000e+01 : f32
    %5 = vector.broadcast %cst_5 : f32 to vector<16x1xf32>
    %6 = arith.divf %4, %5 : vector<16x1xf32>
    %7 = vector.broadcast %6 : vector<16x1xf32> to vector<16x32xf32>
    %8 = arith.subf %0, %7 : vector<16x32xf32>
    %9 = arith.mulf %8, %8 : vector<16x32xf32>
    %cst_6 = arith.constant dense<0.000000e+00> : vector<16xf32>
    %10 = vector.multi_reduction <add>, %9, %cst_6 [1] : vector<16x32xf32> to vector<16xf32>
    %11 = vector.shape_cast %10 : vector<16xf32> to vector<16x1xf32>
    %cst_7 = arith.constant 0.0322580636 : f32
    %12 = vector.broadcast %cst_7 : f32 to vector<16x1xf32>
    %13 = arith.mulf %11, %12 : vector<16x1xf32>
    %14 = math.sqrt %13 : vector<16x1xf32>
    %cst_8 = arith.constant 9.99999997E-7 : f32
    %15 = vector.broadcast %cst_8 : f32 to vector<16x1xf32>
    %16 = arith.addf %14, %15 : vector<16x1xf32>
    %17 = tpu.reciprocal %16 : vector<16x1xf32> -> vector<16x1xf32>
    %18 = vector.broadcast %17 : vector<16x1xf32> to vector<16x32xf32>
    %19 = arith.mulf %8, %18 : vector<16x32xf32>
    %20 = vector.broadcast %1 : vector<1x32xf32> to vector<16x32xf32>
    %21 = arith.mulf %19, %20 : vector<16x32xf32>
    %22 = vector.broadcast %2 : vector<1x32xf32> to vector<16x32xf32>
    %23 = arith.addf %21, %22 : vector<16x32xf32>
    %c0_9 = arith.constant 0 : index
    %c0_10 = arith.constant 0 : index
    %24 = vector.load %arg4[%c0_9, %c0_10] : memref<16x32xf32, #tpu.memory_space<vmem>>, vector<16x32xf32>
    tpu.vector_store %arg4[%c0_9, %c0_10], %23 {strides = array<i32>} : memref<16x32xf32, #tpu.memory_space<vmem>>, vector<16x32xf32>,
    return
  }
  func.func @transform_0(%arg0: i32) -> (i32, i32) {
    %c0_i32 = arith.constant 0 : i32
    %c0_i32_0 = arith.constant 0 : i32
    return %arg0, %c0_i32 : i32, i32
  }
  func.func @transform_1(%arg0: i32) -> (i32, i32) {
    %c0_i32 = arith.constant 0 : i32
    %c0_i32_0 = arith.constant 0 : i32
    %c0_i32_1 = arith.constant 0 : i32
    return %c0_i32, %c0_i32_0 : i32, i32
  }
  func.func @transform_2(%arg0: i32) -> (i32, i32) {
    %c0_i32 = arith.constant 0 : i32
    %c0_i32_0 = arith.constant 0 : i32
    %c0_i32_1 = arith.constant 0 : i32
    return %c0_i32, %c0_i32_0 : i32, i32
  }
  func.func @transform_3(%arg0: i32) -> (i32, i32) {
    %c0_i32 = arith.constant 0 : i32
    %c0_i32_0 = arith.constant 0 : i32
    return %arg0, %c0_i32 : i32, i32
  }
}

</mosaic_0001>

<llo_original>
// kernel: tpu_custom_call.1
$region0: #{tpu_custom_call.1}
  #allocation0 [shape = 'u32[]', space=smem, size = 0x4, offset = 0x4, fixed_abs, tag = 'smem constant byte address 0x4 - core index']
  #allocation1 [shape = 'u32[144,128]{1,0:T(1,128)}', space=vmem, size = 0x12000, scoped, tag = 'internal scratch']
  %s0 = inlined_call_operand.hbm [shape: f32[16,32], index: 0, kind: input, shape index: {}]
  %s1 = inlined_call_operand.vmem [shape: f32[1,32], index: 1, kind: input, shape index: {}]
  %s2 = inlined_call_operand.vmem [shape: f32[1,32], index: 2, kind: input, shape index: {}]
  %s3 = inlined_call_operand.hbm [shape: f32[16,32], index: 3, kind: output, shape index: {}]
  %s4 = sld [smem:[#allocation0]]
  $region26: #{tpu_custom_call.1} parent=0
    _
  %s6 = ssub.s32 1, %s4
  %s7 = scalar_select 0, %s6, %s4
  $region1: #{tpu_custom_call.1} parent=0
    #allocation2 [shape = 'u8[8192]{0}', space=vmem, size = 0x2000, scoped, tag = 'input window, operand 0, single buffered']
    #allocation3 [shape = 's32[1]{0}', space=sflag, size = 0x4, scoped, tag = 'scoped memory for tpu_custom_call.1']
    #allocation4 [shape = 's32[1]{0}', space=sflag, size = 0x4, scoped, tag = 'scoped memory for tpu_custom_call.1']
    #allocation5 [shape = 'u8[8192]{0}', space=vmem, size = 0x2000, scoped, tag = 'output window, operand 0, single buffered']
    %8 = vsyncpa [#allocation3], 0
    %9 = vsyncpa [#allocation4], 0
    // Predicated region
    $region2: #{tpu_custom_call.1} parent=1 // pred_check
      _
    $region3: #{tpu_custom_call.1} parent=1 // pred_check_branch
      %11 = sbr.rel (0) target = $region5
    $region4: #{tpu_custom_call.1} parent=1 // pred_region
      %s13 = ssub.s32 256, 256
      %14 = vsyncadd [#allocation3], %s13
      %s15 = sshll.u32 [#allocation2], 4
      %s16 = int_to_ptr.vmem [resolvable:$true] %s15
      %21 = dma.hbm_to_vmem [thread:$0]  %s0, 256, %s16, [#allocation3], 128, 128, 8
    $region5: #{tpu_custom_call.1} parent=1 // pred_fallthru
      _
    // Predicated region
    $region6: #{tpu_custom_call.1} parent=1 // pred_check
      _
    $region7: #{tpu_custom_call.1} parent=1 // pred_check_branch
      %23 = sbr.rel (0) target = $region9
    $region8: #{tpu_custom_call.1} parent=1 // pred_region
      _
    $region9: #{tpu_custom_call.1} parent=1 // pred_fallthru
      _
    // Predicated region
    $region10: #{tpu_custom_call.1} parent=1 // pred_check
      _
    $region11: #{tpu_custom_call.1} parent=1 // pred_check_branch
      %25 = sbr.rel (0) target = $region13
    $region12: #{tpu_custom_call.1} parent=1 // pred_region
      _
    $region13: #{tpu_custom_call.1} parent=1 // pred_fallthru
      _
    // Predicated region
    $region14: #{tpu_custom_call.1} parent=1 // pred_check
      _
    $region15: #{tpu_custom_call.1} parent=1 // pred_check_branch
      %27 = sbr.rel (0) target = $region17
    $region16: #{tpu_custom_call.1} parent=1 // pred_region
      %28 = dma.done [#allocation3], 256
    $region17: #{tpu_custom_call.1} parent=1 // pred_fallthru
      _
    %v29 = vld [vmem:[#allocation2] sm:$0xff]
    %v30 = vld [vmem:[#allocation2 + $0x8] sm:$0xff]
    %v31 = vld [vmem:[%s1] sm:$0x1]
    %v32 = vld [vmem:[%s2] sm:$0x1]
    %vm33 = vcmask 261120
    %v34 = vsel %vm33, %v29, 0.0
    %35 = vadd.xlane.f32.xlu0 %v34
    %v36 = vpop.xlane.xlu0 %35
    %v37 = vsel %vm33, %v30, 0.0
    %38 = vadd.xlane.f32.xlu0 %v37
    %v39 = vpop.xlane.xlu0 %38
    %v40 = vrcp.pop 32.0
    %v41 = vmul.f32 %v36, %v40
    %v42 = vmul.f32 %v39, %v40
    %v43 = vsub.f32 %v29, %v41
    %v44 = vsub.f32 %v30, %v42
    %v45 = vmul.f32 %v43, %v43
    %v46 = vmul.f32 %v44, %v44
    %v47 = vsel %vm33, %v45, 0.0
    %48 = vadd.xlane.f32.xlu0 %v47
    %v49 = vpop.xlane.xlu0 %48
    %v50 = vsel %vm33, %v46, 0.0
    %51 = vadd.xlane.f32.xlu0 %v50
    %v52 = vpop.xlane.xlu0 %51
    %v53 = vmul.f32 %v49, 0.032258064
    %v54 = vmul.f32 %v52, 0.032258064
    %v55 = vrsqrt.pop %v53
    %v56 = vmul.f32 %v53, %v55
    %vm57 = vcmp.eq.f32.partialorder %v53, inf
    %v58 = vsel %vm57, %v53, %v56
    %vm59 = vcmp.eq.f32.partialorder %v53, 0.0
    %v60 = vand.u32 %v53, 2147483648
    %v61 = vsel %vm59, %v60, %v58
    %v62 = vrsqrt.pop %v54
    %v63 = vmul.f32 %v54, %v62
    %vm64 = vcmp.eq.f32.partialorder %v54, inf
    %v65 = vsel %vm64, %v54, %v63
    %vm66 = vcmp.eq.f32.partialorder %v54, 0.0
    %v67 = vand.u32 %v54, 2147483648
    %v68 = vsel %vm66, %v67, %v65
    %v69 = vadd.f32 %v61, 1e-06
    %v70 = vadd.f32 %v68, 1e-06
    %v71 = vrcp.pop %v69
    %v72 = vrcp.pop %v70
    %v73 = vmul.f32 %v43, %v71
    %v74 = vmul.f32 %v44, %v72
    %v76 = vlaneseq
    %v77 = vshrl.u32 %v76, 7
    %v78 = vsub.s32 0, %v77
    %v79 = vrot.slane %v31, %v78
    %v81 = vmul.f32 %v73, %v79
    %v82 = vmul.f32 %v74, %v79
    %v84 = vlaneseq
    %v85 = vshrl.u32 %v84, 7
    %v86 = vsub.s32 0, %v85
    %v87 = vrot.slane %v32, %v86
    %v89 = vadd.f32 %v81, %v87
    %v90 = vadd.f32 %v82, %v87
    %91 = vst.msk [vmem:[#allocation5] sm:$0xff] %vm33, %v89
    %92 = vst.msk [vmem:[#allocation5 + $0x8] sm:$0xff] %vm33, %v90
    // Predicated region
    $region18: #{tpu_custom_call.1} parent=1 // pred_check
      _
    $region19: #{tpu_custom_call.1} parent=1 // pred_check_branch
      %94 = sbr.rel (0) target = $region21
    $region20: #{tpu_custom_call.1} parent=1 // pred_region
      %s96 = ssub.s32 256, 256
      %97 = vsyncadd [#allocation4], %s96
      %s98 = sshll.u32 [#allocation5], 4
      %s99 = int_to_ptr.vmem [resolvable:$true] %s98
      %104 = dma.vmem_to_hbm [thread:$0]  %s99, 256, %s3, [#allocation4], 128, 128, 8
    $region21: #{tpu_custom_call.1} parent=1 // pred_fallthru
      _
    // Predicated region
    $region22: #{tpu_custom_call.1} parent=1 // pred_check
      _
    $region23: #{tpu_custom_call.1} parent=1 // pred_check_branch
      %106 = sbr.rel (0) target = $region25
    $region24: #{tpu_custom_call.1} parent=1 // pred_region
      %107 = dma.done [#allocation4], 256
    $region25: #{tpu_custom_call.1} parent=1 // pred_fallthru
      _
    %108 = vsyncpa [#allocation3], 1
    %109 = vsyncpa [#allocation4], 1

</llo_original>
